<compile_context>
chip_gen: v7x
topology: tpu7x:2x2x1
jax: 0.10.0
libtpu: 0.0.40
codegen_flags: <defaults>
</compile_context>

<pallas_src>
import jax
import jax.numpy as jnp
from jax.experimental import pallas as pl
from jax.experimental.pallas import tpu as pltpu


def _linear_plus_scalar_kernel(x_smem, wb_ref, o_ref):
    # x_smem : (3,)  f32 in SMEM   -> scalar reads (sreg -> VALU broadcast)
    # wb_ref : (4, 8) f32 in VMEM  -> rows 0..1 = W^T rows, row 2 = W^T[2]+1,
    #                                 row 3 = bias
    # o_ref  : (1, 8) f32 in VMEM
    x0 = x_smem[0]
    x1 = x_smem[1]
    x2 = x_smem[2]

    wb = wb_ref[...]                      # (4, 8), one padded vreg tile
    row0 = wb[0:1, :]                     # (1, 8)
    row1 = wb[1:2, :]
    row2 = wb[2:3, :]                     # already includes the +1.0 fold
    bias = wb[3:4, :]

    # y = x0*W^T[0] + x1*W^T[1] + x2*(W^T[2] + 1) + b
    #   (the +1 was baked into row2 at pack time -> pure 3 FMAs + 1 add)
    o_ref[...] = x0 * row0 + x1 * row1 + x2 * row2 + bias


def pack_params(weight, bias):
    """One-time parameter prep (outside the hot path).

    weight: (8, 3) f32, bias: (8,) f32 -> packed (4, 8) f32:
      rows 0..2 = W^T (with +1.0 folded into row 2 to absorb "+ x1[2]"),
      row 3     = bias.
    """
    wt = weight.T.astype(jnp.float32)                 # (3, 8)
    wt = wt.at[2].add(1.0)                            # fold "+ x1[2]" here
    b_row = bias.reshape(1, 8).astype(jnp.float32)    # (1, 8)
    return jnp.concatenate([wt, b_row], axis=0)       # (4, 8)


@jax.jit
def linear_plus_x2(x, packed_wb):
    """x: (3,) f32; packed_wb: (4, 8) f32 -> (8,) f32."""
    out = pl.pallas_call(
        _linear_plus_scalar_kernel,
        out_shape=jax.ShapeDtypeStruct((1, 8), jnp.float32),
        in_specs=[
            pl.BlockSpec(memory_space=pltpu.MemorySpace.SMEM),   # x as scalars
            pl.BlockSpec(memory_space=pltpu.MemorySpace.VMEM),   # packed W^T+bias
        ],
        out_specs=pl.BlockSpec(memory_space=pltpu.MemorySpace.VMEM),
        # Advisory: 3 FMAs (48 flops) + 8 adds, ~176 B moved, no transcendentals.
        cost_estimate=pl.CostEstimate(
            flops=56, transcendentals=0, bytes_accessed=176
        ),
    )(x.astype(jnp.float32), packed_wb)
    return out.reshape(8)


if __name__ == "__main__":
    key = jax.random.PRNGKey(0)
    kx, kw, kb = jax.random.split(key, 3)

    # Deterministic "parameters" (same shapes as torch.nn.Linear(3, 8, bias=True))
    weight = jax.random.normal(kw, (8, 3), dtype=jnp.float32) * 0.5
    bias = jax.random.normal(kb, (8,), dtype=jnp.float32) * 0.1

    # Input x1 ~ torch.randn(3)
    x1 = jax.random.normal(kx, (3,), dtype=jnp.float32)

    # One-time parameter packing (not per-call layout work).
    packed_wb = jax.block_until_ready(pack_params(weight, bias))

    y = linear_plus_x2(x1, packed_wb)
    y = jax.block_until_ready(y)

    # Reference check in plain JAX
    ref = x1 @ weight.T + bias + x1[2]
    assert y.shape == (8,)
    assert jnp.allclose(y, ref, atol=1e-5, rtol=1e-5), (y, ref)

    print("KERNEL_OK")
</pallas_src>

<mosaic_0001>
module attributes {stable_mosaic.version = 11 : i64} {
  func.func @_linear_plus_scalar_kernel(%arg0: memref<3xf32, #tpu.memory_space<smem>>, %arg1: memref<4x8xf32, #tpu.memory_space<vmem>>, %arg2: memref<1x8xf32, #tpu.memory_space<vmem>>) attributes {dimension_semantics = [], scalar_prefetch = 0 : i64, scratch_operands = 0 : i64, tpu.core_type = #tpu.core_type<tc>} {
    %c0 = arith.constant 0 : index
    %0 = memref.load %arg0[%c0] : memref<3xf32, #tpu.memory_space<smem>>
    %c1 = arith.constant 1 : index
    %1 = memref.load %arg0[%c1] : memref<3xf32, #tpu.memory_space<smem>>
    %c2 = arith.constant 2 : index
    %2 = memref.load %arg0[%c2] : memref<3xf32, #tpu.memory_space<smem>>
    %c0_0 = arith.constant 0 : index
    %c0_1 = arith.constant 0 : index
    %3 = vector.load %arg1[%c0_0, %c0_1] : memref<4x8xf32, #tpu.memory_space<vmem>>, vector<4x8xf32>
    %4 = vector.extract_strided_slice %3 {offsets = [0, 0], sizes = [1, 8], strides = [1, 1]} : vector<4x8xf32> to vector<1x8xf32>
    %5 = vector.extract_strided_slice %3 {offsets = [1, 0], sizes = [1, 8], strides = [1, 1]} : vector<4x8xf32> to vector<1x8xf32>
    %6 = vector.extract_strided_slice %3 {offsets = [2, 0], sizes = [1, 8], strides = [1, 1]} : vector<4x8xf32> to vector<1x8xf32>
    %7 = vector.extract_strided_slice %3 {offsets = [3, 0], sizes = [1, 8], strides = [1, 1]} : vector<4x8xf32> to vector<1x8xf32>
    %8 = vector.broadcast %0 : f32 to vector<1x8xf32>
    %9 = arith.mulf %8, %4 : vector<1x8xf32>
    %10 = vector.broadcast %1 : f32 to vector<1x8xf32>
    %11 = arith.mulf %10, %5 : vector<1x8xf32>
    %12 = arith.addf %9, %11 : vector<1x8xf32>
    %13 = vector.broadcast %2 : f32 to vector<1x8xf32>
    %14 = arith.mulf %13, %6 : vector<1x8xf32>
    %15 = arith.addf %12, %14 : vector<1x8xf32>
    %16 = arith.addf %15, %7 : vector<1x8xf32>
    %c0_2 = arith.constant 0 : index
    %c0_3 = arith.constant 0 : index
    %17 = vector.load %arg2[%c0_2, %c0_3] : memref<1x8xf32, #tpu.memory_space<vmem>>, vector<1x8xf32>
    tpu.vector_store %arg2[%c0_2, %c0_3], %16 {strides = array<i32>} : memref<1x8xf32, #tpu.memory_space<vmem>>, vector<1x8xf32>,
    return
  }
}

</mosaic_0001>

<llo_original>
// kernel: linear_plus_x2.1
$region0: #{linear_plus_x2.1}
  #allocation0 [shape = 'u32[]', space=smem, size = 0x4, offset = 0x4, fixed_abs, tag = 'smem constant byte address 0x4 - core index']
  #allocation1 [shape = 'u32[144,128]{1,0:T(1,128)}', space=vmem, size = 0x12000, scoped, tag = 'internal scratch']
  %s0 = inlined_call_operand.hbm [shape: f32[3], index: 0, kind: input, shape index: {}]
  %s1 = inlined_call_operand.hbm [shape: f32[4,8], index: 1, kind: input, shape index: {}]
  %s2 = inlined_call_operand.hbm [shape: f32[1,8], index: 2, kind: output, shape index: {}]
  %s3 = sld [smem:[#allocation0]]
  $region26: #{linear_plus_x2.1} parent=0
    _
  %s5 = ssub.s32 1, %s3
  %s6 = scalar_select 0, %s5, %s3
  $region1: #{linear_plus_x2.1} parent=0
    #allocation2 [shape = 'u8[512]{0}', space=smem, size = 0x200, scoped, tag = 'input window, operand 0, single buffered']
    #allocation3 [shape = 's32[1]{0}', space=sflag, size = 0x4, scoped, tag = 'scoped memory for linear_plus_x2.1']
    #allocation4 [shape = 's32[1]{0}', space=sflag, size = 0x4, scoped, tag = 'scoped memory for linear_plus_x2.1']
    #allocation5 [shape = 's32[1]{0}', space=sflag, size = 0x4, scoped, tag = 'scoped memory for linear_plus_x2.1']
    #allocation6 [shape = 'u8[2048]{0}', space=vmem, size = 0x800, scoped, tag = 'input window, operand 1, single buffered']
    #allocation7 [shape = 'u8[512]{0}', space=vmem, size = 0x400, scoped, tag = 'output window, operand 0, single buffered']
    %7 = vsyncpa [#allocation5], 0
    %8 = vsyncpa [#allocation3], 0
    %9 = vsyncpa [#allocation4], 0
    // Predicated region
    $region2: #{linear_plus_x2.1} parent=1 // pred_check
      _
    $region3: #{linear_plus_x2.1} parent=1 // pred_check_branch
      %11 = sbr.rel (0) target = $region5
    $region4: #{linear_plus_x2.1} parent=1 // pred_region
      %s13 = ssub.s32 16, 16
      %14 = vsyncadd [#allocation5], %s13
      %17 = dma.hbm_to_smem %s0, 16, [#allocation2], [#allocation5]
    $region5: #{linear_plus_x2.1} parent=1 // pred_fallthru
      _
    // Predicated region
    $region6: #{linear_plus_x2.1} parent=1 // pred_check
      _
    $region7: #{linear_plus_x2.1} parent=1 // pred_check_branch
      %19 = sbr.rel (0) target = $region9
    $region8: #{linear_plus_x2.1} parent=1 // pred_region
      %s21 = ssub.s32 64, 64
      %22 = vsyncadd [#allocation3], %s21
      %s24 = sshll.u32 [#allocation6], 4
      %s25 = int_to_ptr.vmem [resolvable:$true] %s24
      %27 = dma.hbm_to_vmem [thread:$0]  %s1, 64, %s25, [#allocation3]
    $region9: #{linear_plus_x2.1} parent=1 // pred_fallthru
      _
    // Predicated region
    $region10: #{linear_plus_x2.1} parent=1 // pred_check
      _
    $region11: #{linear_plus_x2.1} parent=1 // pred_check_branch
      %29 = sbr.rel (0) target = $region13
    $region12: #{linear_plus_x2.1} parent=1 // pred_region
      %30 = dma.done [#allocation5], 16
    $region13: #{linear_plus_x2.1} parent=1 // pred_fallthru
      _
    // Predicated region
    $region14: #{linear_plus_x2.1} parent=1 // pred_check
      _
    $region15: #{linear_plus_x2.1} parent=1 // pred_check_branch
      %32 = sbr.rel (0) target = $region17
    $region16: #{linear_plus_x2.1} parent=1 // pred_region
      %33 = dma.done [#allocation3], 64
    $region17: #{linear_plus_x2.1} parent=1 // pred_fallthru
      _
    %34 = sfence
    %s35 = sld [smem:[#allocation2]]
    %s36 = sld [smem:[#allocation2 + $0x1]]
    %s37 = sld [smem:[#allocation2 + $0x2]]
    %v38 = vld [vmem:[#allocation6] sm:$0xf]
    %v39 = vstv %s35
    %v40 = vmul.f32 %v39, %v38
    %v41 = vstv %s36
    %v42 = vmul.f32 %v41, %v38
    %v44 = vrot.slane %v42, 1
    %v46 = vadd.f32 %v40, %v44
    %v47 = vstv %s37
    %v48 = vmul.f32 %v47, %v38
    %v50 = vrot.slane %v48, 2
    %v52 = vadd.f32 %v46, %v50
    %v54 = vrot.slane %v38, 3
    %v56 = vadd.f32 %v52, %v54
    %vm57 = vcmask 57344
    %58 = vst.msk [vmem:[#allocation7] sm:$0x1] %vm57, %v56
    // Predicated region
    $region18: #{linear_plus_x2.1} parent=1 // pred_check
      _
    $region19: #{linear_plus_x2.1} parent=1 // pred_check_branch
      %60 = sbr.rel (0) target = $region21
    $region20: #{linear_plus_x2.1} parent=1 // pred_region
      %s62 = ssub.s32 16, 16
      %63 = vsyncadd [#allocation4], %s62
      %s65 = sshll.u32 [#allocation7], 4
      %s66 = int_to_ptr.vmem [resolvable:$true] %s65
      %68 = dma.vmem_to_hbm [thread:$0]  %s66, 16, %s2, [#allocation4]
    $region21: #{linear_plus_x2.1} parent=1 // pred_fallthru
      _
    // Predicated region
    $region22: #{linear_plus_x2.1} parent=1 // pred_check
      _
    $region23: #{linear_plus_x2.1} parent=1 // pred_check_branch
      %70 = sbr.rel (0) target = $region25
    $region24: #{linear_plus_x2.1} parent=1 // pred_region
      %71 = dma.done [#allocation4], 16
    $region25: #{linear_plus_x2.1} parent=1 // pred_fallthru
      _
    %72 = vsyncpa [#allocation3], 1
    %73 = vsyncpa [#allocation4], 1
    %74 = vsyncpa [#allocation5], 1

</llo_original>
